<compile_context>
chip_gen: v7x
topology: tpu7x:2x2x1
jax: 0.10.0
libtpu: 0.0.40
codegen_flags: <defaults>
</compile_context>

<pallas_src>
import jax
import jax.numpy as jnp
from jax.experimental import pallas as pl
from jax.experimental.pallas import tpu as pltpu


def _round_up(x, m):
    return ((x + m - 1) // m) * m


def _make_kernel(inner_dtype):
    def _mlp_scorer_kernel(q_ref, kt_ref, w1q_ref, w1kT_ref, b1_ref, w2_ref,
                           b2_ref, o_ref, qp_ref):
        # q_ref:   (1, Tt, M)      kt_ref: (1, N, Ts)   (keys pre-transposed)
        # w1q_ref: (M, H)          w1kT_ref: (H, N)
        # b1_ref:  (H, 1)          w2_ref: (H, 1)       b2_ref: (1,) in SMEM
        # o_ref:   (1, Tt, Ts)     qp_ref: (Tt, H) VMEM scratch

        # qp depends only on (b, t): compute once per t-tile (s == 0) and cache.
        @pl.when(pl.program_id(2) == 0)
        def _():
            qp_ref[...] = jnp.dot(q_ref[0], w1q_ref[...],
                                  preferred_element_type=jnp.float32)

        # kp^T = W1_k^T @ k^T, with b1 folded in:  (H, N) @ (N, Ts) -> (H, Ts)
        kpT = (jnp.dot(w1kT_ref[...], kt_ref[0],
                       preferred_element_type=jnp.float32)
               + b1_ref[...])

        qp = qp_ref[...].astype(inner_dtype)          # (Tt, H)
        kpT = kpT.astype(inner_dtype)                  # (H, Ts)

        # Hidden tile laid out (Tt, H, Ts): H on sublanes, Ts (lane-dense) on lanes.
        h = jnp.tanh(qp[:, :, None] + kpT[None, :, :])  # (Tt, H, Ts)

        # Second Linear (H -> 1): contract H (sublane axis); result is lane-dense.
        s = jnp.sum(h * w2_ref[...][None, :, :], axis=1) + b2_ref[0]  # (Tt, Ts) f32
        o_ref[0] = jnp.tanh(s).astype(o_ref.dtype)

    return _mlp_scorer_kernel


def mlp_scorer(query, keys, params, *, inner_dtype=jnp.float32):
    """query: (bs, T, M) f32, keys: (bs, S, N) f32 -> (bs, T, S) f32.

    inner_dtype=jnp.bfloat16 can be used on v6e/v7x to double EUP (tanh)
    throughput; default is f32 (safe on v5e, exact vs. reference).
    """
    w1q, w1k, b1, w2, b2 = params
    bs, T, M = query.shape
    bs2, S, N = keys.shape
    assert bs == bs2
    H = w1q.shape[1]
    assert w1q.shape == (M, H) and w1k.shape == (N, H)
    assert b1.shape == (H,) and w2.shape == (H,) and b2.shape == ()

    # ---- tile selection: lane-dense S tiles, VMEM-bounded T tiles ----
    ts = min(256, _round_up(S, 128))          # multiple of 128 -> unmasked stores
    t8 = _round_up(T, 8)
    budget = 40 * 1024 * 1024                 # conservative live-set budget (all gens)
    tt = 8
    for cand in (128, 64, 32, 16, 8):
        if cand <= t8 and 6 * cand * ts * H * 4 <= budget:
            tt = cand
            break
    Tp = _round_up(T, tt)
    Sp = _round_up(S, ts)

    # ---- layout plumbing in the wrapper (one-time, outside the kernel) ----
    q_p = jnp.pad(query, ((0, 0), (0, Tp - T), (0, 0)))        # (bs, Tp, M)
    k_p = jnp.pad(keys, ((0, 0), (0, Sp - S), (0, 0)))         # (bs, Sp, N)
    k_t = jnp.swapaxes(k_p, 1, 2)                              # (bs, N, Sp)
    w1kT = w1k.T                                               # (H, N)
    b1c = b1.reshape(H, 1)
    w2c = w2.reshape(H, 1)
    b2s = b2.reshape(1)

    grid = (bs, Tp // tt, Sp // ts)
    grid_spec = pltpu.PrefetchScalarGridSpec(
        num_scalar_prefetch=0,
        grid=grid,
        in_specs=[
            pl.BlockSpec((1, tt, M), lambda b, t, s: (b, t, 0)),   # query tile
            pl.BlockSpec((1, N, ts), lambda b, t, s: (b, 0, s)),   # keys^T tile
            pl.BlockSpec((M, H), lambda b, t, s: (0, 0)),          # W1_q
            pl.BlockSpec((H, N), lambda b, t, s: (0, 0)),          # W1_k^T
            pl.BlockSpec((H, 1), lambda b, t, s: (0, 0)),          # b1 column
            pl.BlockSpec((H, 1), lambda b, t, s: (0, 0)),          # w2 column
            pl.BlockSpec(memory_space=pltpu.MemorySpace.SMEM),     # b2 scalar
        ],
        out_specs=pl.BlockSpec((1, tt, ts), lambda b, t, s: (b, t, s)),
        scratch_shapes=[pltpu.VMEM((tt, H), jnp.float32)],         # cached qp
    )

    out_p = pl.pallas_call(
        _make_kernel(inner_dtype),
        out_shape=jax.ShapeDtypeStruct((bs, Tp, Sp), jnp.float32),
        grid_spec=grid_spec,
        compiler_params=pltpu.CompilerParams(
            dimension_semantics=("parallel", "parallel", "arbitrary"),
            vmem_limit_bytes=48 * 1024 * 1024),
    )(q_p, k_t, w1q, w1kT, b1c, w2c, b2s)

    return out_p[:, :T, :S]


def init_params(key, query_size, key_size, hidden=None):
    """Deterministic synthetic parameters (shapes match MLPScorer defaults)."""
    if hidden is None:
        hidden = (query_size + key_size) // 2
    k1, k2, k3, k4 = jax.random.split(key, 4)
    in1 = query_size + key_size
    # nn.Linear weight is (out, in); we store the transposed (in, out) matmul form
    # and split it along the input axis into the query part and the key part.
    w1 = jax.random.normal(k1, (in1, hidden), jnp.float32) / jnp.sqrt(in1)
    w1q = w1[:query_size]                                    # (M, H)
    w1k = w1[query_size:]                                    # (N, H)
    b1 = jax.random.normal(k2, (hidden,), jnp.float32) * 0.1
    w2 = jax.random.normal(k3, (hidden,), jnp.float32) / jnp.sqrt(hidden)
    b2 = jax.random.normal(k4, (), jnp.float32) * 0.1
    return w1q, w1k, b1, w2, b2


def mlp_scorer_reference(query, keys, params):
    """Pure-JAX reference mirroring the PyTorch forward exactly."""
    w1q, w1k, b1, w2, b2 = params
    bs, T, M = query.shape
    _, S, N = keys.shape
    xq = jnp.broadcast_to(query[:, :, None, :], (bs, T, S, M))
    xk = jnp.broadcast_to(keys[:, None, :, :], (bs, T, S, N))
    x = jnp.concatenate([xq, xk], axis=-1)                   # (bs,T,S,M+N)
    w1 = jnp.concatenate([w1q, w1k], axis=0)                 # (M+N, H)
    h = jnp.tanh(x @ w1 + b1)                                # (bs,T,S,H)
    out = jnp.tanh(h @ w2 + b2)                              # (bs,T,S)
    return out


if __name__ == "__main__":
    bs, T, S = 2, 8, 8
    query_size, key_size = 32, 32

    root = jax.random.PRNGKey(0)
    kq, kk, kparam = jax.random.split(root, 3)
    query = jax.random.normal(kq, (bs, T, query_size), jnp.float32)
    keys = jax.random.normal(kk, (bs, S, key_size), jnp.float32)
    params = init_params(kparam, query_size, key_size)

    out = mlp_scorer(query, keys, params)
    out = jax.block_until_ready(out)

    ref = mlp_scorer_reference(query, keys, params)
    assert out.shape == (bs, T, S), out.shape
    err = float(jnp.max(jnp.abs(out - ref)))
    assert err < 1e-5, err

    print("KERNEL_OK")
</pallas_src>

<mosaic_0001>
module attributes {stable_mosaic.version = 11 : i64} {
  func.func @_mlp_scorer_kernel(%arg0: i32, %arg1: i32, %arg2: i32, %arg3: memref<1x8x32xf32, #tpu.memory_space<vmem>>, %arg4: memref<1x32x128xf32, #tpu.memory_space<vmem>>, %arg5: memref<32x32xf32, #tpu.memory_space<vmem>>, %arg6: memref<32x32xf32, #tpu.memory_space<vmem>>, %arg7: memref<32x1xf32, #tpu.memory_space<vmem>>, %arg8: memref<32x1xf32, #tpu.memory_space<vmem>>, %arg9: memref<1xf32, #tpu.memory_space<smem>>, %arg10: memref<1x8x128xf32, #tpu.memory_space<vmem>>, %arg11: memref<8x32xf32, #tpu.memory_space<vmem>>) attributes {dimension_semantics = [#tpu.dimension_semantics<parallel>, #tpu.dimension_semantics<parallel>, #tpu.dimension_semantics<arbitrary>], iteration_bounds = array<i64: 2, 1, 1>, scalar_prefetch = 0 : i64, scratch_operands = 1 : i64, tpu.core_type = #tpu.core_type<tc>, window_params = [{transform_indices = @transform_0, window_bounds = array<i64: 1, 8, 32>}, {transform_indices = @transform_1, window_bounds = array<i64: 1, 32, 128>}, {pipeline_mode = #tpu.pipeline_mode<synchronous>, transform_indices = @transform_2, window_bounds = array<i64: 32, 32>}, {pipeline_mode = #tpu.pipeline_mode<synchronous>, transform_indices = @transform_3, window_bounds = array<i64: 32, 32>}, {pipeline_mode = #tpu.pipeline_mode<synchronous>, transform_indices = @transform_4, window_bounds = array<i64: 32, 1>}, {pipeline_mode = #tpu.pipeline_mode<synchronous>, transform_indices = @transform_5, window_bounds = array<i64: 32, 1>}, {transform_indices = @transform_6, window_bounds = array<i64: 1>}, {transform_indices = @transform_7, window_bounds = array<i64: 1, 8, 128>}]} {
    %c0_i32 = arith.constant 0 : i32
    %0 = arith.cmpi eq, %arg2, %c0_i32 : i32
    %1 = arith.extui %0 : i1 to i32
    %c0_i32_0 = arith.constant 0 : i32
    %2 = arith.cmpi ne, %1, %c0_i32_0 : i32
    scf.if %2 {
      %c0_16 = arith.constant 0 : index
      %c0_17 = arith.constant 0 : index
      %c0_18 = arith.constant 0 : index
      %29 = vector.load %arg3[%c0_16, %c0_17, %c0_18] : memref<1x8x32xf32, #tpu.memory_space<vmem>>, vector<1x8x32xf32>
      %30 = vector.shape_cast %29 : vector<1x8x32xf32> to vector<8x32xf32>
      %c0_19 = arith.constant 0 : index
      %c0_20 = arith.constant 0 : index
      %31 = vector.load %arg5[%c0_19, %c0_20] : memref<32x32xf32, #tpu.memory_space<vmem>>, vector<32x32xf32>
      %cst_21 = arith.constant dense<0.000000e+00> : vector<8x32xf32>
      %32 = tpu.matmul %30, %31, %cst_21 {dimension_numbers = #tpu.dot_dimension_numbers<[1], [0], [0], [1], [0, 0, 1, 1], [], []>} : vector<8x32xf32>, vector<32x32xf32>, vector<8x32xf32> -> vector<8x32xf32>
      %c0_22 = arith.constant 0 : index
      %c0_23 = arith.constant 0 : index
      %33 = vector.load %arg11[%c0_22, %c0_23] : memref<8x32xf32, #tpu.memory_space<vmem>>, vector<8x32xf32>
      tpu.vector_store %arg11[%c0_22, %c0_23], %32 {strides = array<i32>} : memref<8x32xf32, #tpu.memory_space<vmem>>, vector<8x32xf32>,
    } else {
    }
    %c0 = arith.constant 0 : index
    %c0_1 = arith.constant 0 : index
    %3 = vector.load %arg6[%c0, %c0_1] : memref<32x32xf32, #tpu.memory_space<vmem>>, vector<32x32xf32>
    %c0_2 = arith.constant 0 : index
    %c0_3 = arith.constant 0 : index
    %c0_4 = arith.constant 0 : index
    %4 = vector.load %arg4[%c0_2, %c0_3, %c0_4] : memref<1x32x128xf32, #tpu.memory_space<vmem>>, vector<1x32x128xf32>
    %5 = vector.shape_cast %4 : vector<1x32x128xf32> to vector<32x128xf32>
    %cst = arith.constant dense<0.000000e+00> : vector<32x128xf32>
    %6 = tpu.matmul %3, %5, %cst {dimension_numbers = #tpu.dot_dimension_numbers<[1], [0], [0], [1], [0, 0, 1, 1], [], []>} : vector<32x32xf32>, vector<32x128xf32>, vector<32x128xf32> -> vector<32x128xf32>
    %c0_5 = arith.constant 0 : index
    %c0_6 = arith.constant 0 : index
    %7 = vector.load %arg7[%c0_5, %c0_6] : memref<32x1xf32, #tpu.memory_space<vmem>>, vector<32x1xf32>
    %8 = vector.broadcast %7 : vector<32x1xf32> to vector<32x128xf32>
    %9 = arith.addf %6, %8 : vector<32x128xf32>
    %c0_7 = arith.constant 0 : index
    %c0_8 = arith.constant 0 : index
    %10 = vector.load %arg11[%c0_7, %c0_8] : memref<8x32xf32, #tpu.memory_space<vmem>>, vector<8x32xf32>
    %11 = vector.shape_cast %10 : vector<8x32xf32> to vector<8x32x1xf32>
    %12 = vector.shape_cast %9 : vector<32x128xf32> to vector<1x32x128xf32>
    %13 = vector.broadcast %11 : vector<8x32x1xf32> to vector<8x32x128xf32>
    %14 = vector.broadcast %12 : vector<1x32x128xf32> to vector<8x32x128xf32>
    %15 = arith.addf %13, %14 : vector<8x32x128xf32>
    %16 = math.tanh %15 : vector<8x32x128xf32>
    %c0_9 = arith.constant 0 : index
    %c0_10 = arith.constant 0 : index
    %17 = vector.load %arg8[%c0_9, %c0_10] : memref<32x1xf32, #tpu.memory_space<vmem>>, vector<32x1xf32>
    %18 = vector.shape_cast %17 : vector<32x1xf32> to vector<1x32x1xf32>
    %19 = vector.broadcast %18 : vector<1x32x1xf32> to vector<8x32x128xf32>
    %20 = arith.mulf %16, %19 : vector<8x32x128xf32>
    %cst_11 = arith.constant dense<0.000000e+00> : vector<8x128xf32>
    %21 = vector.multi_reduction <add>, %20, %cst_11 [1] : vector<8x32x128xf32> to vector<8x128xf32>
    %c0_12 = arith.constant 0 : index
    %22 = memref.load %arg9[%c0_12] : memref<1xf32, #tpu.memory_space<smem>>
    %23 = vector.broadcast %22 : f32 to vector<8x128xf32>
    %24 = arith.addf %21, %23 : vector<8x128xf32>
    %25 = math.tanh %24 : vector<8x128xf32>
    %c0_13 = arith.constant 0 : index
    %c0_14 = arith.constant 0 : index
    %c0_15 = arith.constant 0 : index
    %26 = vector.load %arg10[%c0_13, %c0_14, %c0_15] : memref<1x8x128xf32, #tpu.memory_space<vmem>>, vector<1x8x128xf32>
    %27 = vector.shape_cast %26 : vector<1x8x128xf32> to vector<8x128xf32>
    %28 = vector.shape_cast %25 : vector<8x128xf32> to vector<1x8x128xf32>
    tpu.vector_store %arg10[%c0_13, %c0_14, %c0_15], %28 {strides = array<i32>} : memref<1x8x128xf32, #tpu.memory_space<vmem>>, vector<1x8x128xf32>,
    return
  }
  func.func @transform_0(%arg0: i32, %arg1: i32, %arg2: i32) -> (i32, i32, i32) {
    %c0_i32 = arith.constant 0 : i32
    %c0_i32_0 = arith.constant 0 : i32
    return %arg0, %arg1, %c0_i32 : i32, i32, i32
  }
  func.func @transform_1(%arg0: i32, %arg1: i32, %arg2: i32) -> (i32, i32, i32) {
    %c0_i32 = arith.constant 0 : i32
    %c0_i32_0 = arith.constant 0 : i32
    return %arg0, %c0_i32, %arg2 : i32, i32, i32
  }
  func.func @transform_2(%arg0: i32, %arg1: i32, %arg2: i32) -> (i32, i32) {
    %c0_i32 = arith.constant 0 : i32
    %c0_i32_0 = arith.constant 0 : i32
    %c0_i32_1 = arith.constant 0 : i32
    return %c0_i32, %c0_i32_0 : i32, i32
  }
  func.func @transform_3(%arg0: i32, %arg1: i32, %arg2: i32) -> (i32, i32) {
    %c0_i32 = arith.constant 0 : i32
    %c0_i32_0 = arith.constant 0 : i32
    %c0_i32_1 = arith.constant 0 : i32
    return %c0_i32, %c0_i32_0 : i32, i32
  }
  func.func @transform_4(%arg0: i32, %arg1: i32, %arg2: i32) -> (i32, i32) {
    %c0_i32 = arith.constant 0 : i32
    %c0_i32_0 = arith.constant 0 : i32
    %c0_i32_1 = arith.constant 0 : i32
    return %c0_i32, %c0_i32_0 : i32, i32
  }
  func.func @transform_5(%arg0: i32, %arg1: i32, %arg2: i32) -> (i32, i32) {
    %c0_i32 = arith.constant 0 : i32
    %c0_i32_0 = arith.constant 0 : i32
    %c0_i32_1 = arith.constant 0 : i32
    return %c0_i32, %c0_i32_0 : i32, i32
  }
  func.func @transform_6(%arg0: i32, %arg1: i32, %arg2: i32) -> i32 {
    %c0_i32 = arith.constant 0 : i32
    %c0_i32_0 = arith.constant 0 : i32
    return %c0_i32 : i32
  }
  func.func @transform_7(%arg0: i32, %arg1: i32, %arg2: i32) -> (i32, i32, i32) {
    %c0_i32 = arith.constant 0 : i32
    return %arg0, %arg1, %arg2 : i32, i32, i32
  }
}

</mosaic_0001>

<llo_original>
// kernel: tpu_custom_call.1
$region0: #{tpu_custom_call.1}
  #allocation0 [shape = 'u32[]', space=smem, size = 0x4, offset = 0x4, fixed_abs, tag = 'smem constant byte address 0x4 - core index']
  #allocation1 [shape = 'u32[144,128]{1,0:T(1,128)}', space=vmem, size = 0x12000, scoped, tag = 'internal scratch']
  #allocation2 [shape = 'f32[8,32]{1,0:T(8,128)}', space=vmem, size = 0x1000, scoped, tag = 'scratch operand']
  #allocation3 [shape = 'f32[1]{0:T(128)S(6)}', space=smem, size = 0x200, scoped, tag = 'scoped memory for tpu_custom_call.1']
  %s0 = inlined_call_operand.hbm [shape: f32[2,8,32], index: 0, kind: input, shape index: {}]
  %s1 = inlined_call_operand.vmem [shape: f32[2,32,128], index: 1, kind: input, shape index: {}]
  %s2 = inlined_call_operand.hbm [shape: f32[32,32], index: 2, kind: input, shape index: {}]
  %s3 = inlined_call_operand.hbm [shape: f32[32,32], index: 3, kind: input, shape index: {}]
  %s4 = inlined_call_operand.vmem [shape: f32[32,1], index: 4, kind: input, shape index: {}]
  %s5 = inlined_call_operand.vmem [shape: f32[32,1], index: 5, kind: input, shape index: {}]
  %s6 = inlined_call_operand.<no memory space> [shape: f32[1], index: 6, kind: input, shape index: {}]
  %s7 = inlined_call_operand.hbm [shape: f32[2,8,128], index: 7, kind: output, shape index: {}]
  %s8 = sld [smem:[#allocation0]]
  $region77: #{tpu_custom_call.1} parent=0
    _
  %s10 = ssub.s32 1, %s8
  %s11 = scalar_select 0, %s10, %s8
  %12 = sst [smem:[#allocation3]] %s6
  $region1: #{tpu_custom_call.1} parent=0
    #allocation4 [shape = 'u8[8192]{0}', space=vmem, size = 0x2000, scoped, tag = 'input window, operand 0']
    #allocation5 [shape = 's32[2]{0}', space=sflag, size = 0x8, scoped, tag = 'scoped memory for tpu_custom_call.1']
    #allocation6 [shape = 's32[2]{0}', space=sflag, size = 0x8, scoped, tag = 'scoped memory for tpu_custom_call.1']
    #allocation7 [shape = 'u8[16384]{0}', space=vmem, size = 0x4000, scoped, tag = 'input window, operand 2, single buffered']
    #allocation8 [shape = 's32[1]{0}', space=sflag, size = 0x4, scoped, tag = 'scoped memory for tpu_custom_call.1']
    #allocation9 [shape = 'u8[16384]{0}', space=vmem, size = 0x4000, scoped, tag = 'input window, operand 3, single buffered']
    #allocation10 [shape = 'u8[8192]{0}', space=vmem, size = 0x2000, scoped, tag = 'output window, operand 0']
    %13 = vsyncpa [#allocation5], 0
    %s14 = scalar_lea.sflag [#allocation5], 1
    %15 = vsyncpa %s14, 0
    %16 = vsyncpa [#allocation8], 0
    %17 = vsyncpa [#allocation6], 0
    %s18 = scalar_lea.sflag [#allocation6], 1
    %19 = vsyncpa %s18, 0
    loop: start=0, step=1, limit=4
    $region2: #{tpu_custom_call.1} parent=1 // loop_pre_header
      _
    $region3: #{tpu_custom_call.1} parent=1 // loop_header
      %s21 = sphi 0, %s25
      %p22 = scmp.ge.s32.totalorder %s21, 4
      %s28 = sphi 0, %s47
      %s29 = sphi 0, %s43
      %s30 = sphi 0, %s39
      %s31 = sphi 0, %s28
      %s32 = sphi 0, %s29
      %s33 = sphi 0, %s30
      %s34 = sphi 0, %s31
      %s35 = sphi 0, %s32
      %s36 = sphi 0, %s33
      %s52 = sphi 0, %s54
      %s55 = sphi 0, %s52
      %s56 = sphi 0, %s55
      %s72 = sphi 0, %s56
      %s80 = sphi 0, %s82
      %s83 = sphi 0, %s80
      %s84 = sphi 0, %s83
      %s100 = sphi 0, %s84
      %s104 = sphi 0, %s104
      %s106 = sphi 0, %s104
      %s107 = sphi 0, %s106
      %s121 = sphi 0, %s107
      %s125 = sphi 0, %s125
      %s127 = sphi 0, %s125
      %s128 = sphi 0, %s127
      %s142 = sphi 0, %s128
      %s146 = sphi 0, %s146
      %s148 = sphi 0, %s146
      %s149 = sphi 0, %s148
      %s163 = sphi 0, %s149
      %s167 = sphi 0, %s167
      %s169 = sphi 0, %s167
      %s170 = sphi 0, %s169
      %s184 = sphi 0, %s170
      %s188 = sphi 0, %s188
      %s190 = sphi 0, %s188
      %s191 = sphi 0, %s190
      %s205 = sphi 0, %s191
      %s215 = sphi 0, %s217
      %s218 = sphi 0, %s215
      %s219 = sphi 0, %s218
      %s235 = sphi 0, %s219
    $region4: #{tpu_custom_call.1} parent=1 // loop_header_branch
      %24 = sbr.rel (%p22) target = $region8
    $region5: #{tpu_custom_call.1} parent=1 // loop_body
      %s26 = ssub.s32 %s21, 1
      %s27 = ssub.s32 %s21, 2
      %s37 = sadd.s32 1, %s30
      %p38 = scmp.ge.s32.totalorder %s37, 1
      %s39 = scalar_select %p38, 0, %s37
      %s40 = sadd.s32 1, %s29
      %s41 = scalar_select %p38, %s40, %s29
      %p42 = scmp.ge.s32.totalorder %s41, 1
      %s43 = scalar_select %p42, 0, %s41
      %s44 = sadd.s32 1, %s28
      %s45 = scalar_select %p42, %s44, %s28
      %p46 = scmp.ge.s32.totalorder %s45, 2
      %s47 = scalar_select %p46, 0, %s45
      %s48 = ssub.s32 %s28, %s47
      %s49 = ssub.s32 %s29, %s43
      %s50 = sor.u32 %s48, %s49
      %p51 = scmp.eq.s32.totalorder %s50, 0
      %s53 = sadd.s32 %s52, 1
      %s54 = scalar_select %p51, %s52, %s53
      %p57 = pneg %p51
      %p58 = scmp.eq.s32.totalorder %s21, 1
      %p59 = por %p57, %p58
      %p60 = scmp.ne.s32.totalorder %s52, %s55
      %p61 = scmp.eq.s32.totalorder %s21, 0
      %p62 = por %p60, %p61
      %p63 = scmp.ne.s32.totalorder %s52, %s55
      %p64 = scmp.eq.s32.totalorder %s26, 1
      %p65 = por %p63, %p64
      %p66 = scmp.ne.s32.totalorder %s55, %s56
      %p67 = scmp.eq.s32.totalorder %s26, 0
      %p68 = por %p66, %p67
      %p69 = scmp.ne.s32.totalorder %s55, %s56
      %p70 = scmp.eq.s32.totalorder %s27, 1
      %p71 = por %p69, %p70
      %p73 = scmp.ne.s32.totalorder %s56, %s72
      %p74 = scmp.eq.s32.totalorder %s27, 0
      %p75 = por %p73, %p74
      %s76 = ssub.s32 %s28, %s47
      %s77 = ssub.s32 %s30, %s39
      %s78 = sor.u32 %s76, %s77
      %p79 = scmp.eq.s32.totalorder %s78, 0
      %s81 = sadd.s32 %s80, 1
      %s82 = scalar_select %p79, %s80, %s81
      %p85 = pneg %p79
      %p86 = scmp.eq.s32.totalorder %s21, 1
      %p87 = por %p85, %p86
      %p88 = scmp.ne.s32.totalorder %s80, %s83
      %p89 = scmp.eq.s32.totalorder %s21, 0
      %p90 = por %p88, %p89
      %p91 = scmp.ne.s32.totalorder %s80, %s83
      %p92 = scmp.eq.s32.totalorder %s26, 1
      %p93 = por %p91, %p92
      %p94 = scmp.ne.s32.totalorder %s83, %s84
      %p95 = scmp.eq.s32.totalorder %s26, 0
      %p96 = por %p94, %p95
      %p97 = scmp.ne.s32.totalorder %s83, %s84
      %p98 = scmp.eq.s32.totalorder %s27, 1
      %p99 = por %p97, %p98
      %p101 = scmp.ne.s32.totalorder %s84, %s100
      %p102 = scmp.eq.s32.totalorder %s27, 0
      %p103 = por %p101, %p102
      %s105 = sadd.s32 %s104, 1
      %p108 = scmp.eq.s32.totalorder %s21, 1
      %p109 = scmp.ne.s32.totalorder %s104, %s106
      %p110 = scmp.eq.s32.totalorder %s21, 0
      %p111 = por %p109, %p110
      %p112 = scmp.ne.s32.totalorder %s104, %s106
      %p113 = scmp.eq.s32.totalorder %s26, 1
      %p114 = por %p112, %p113
      %p115 = scmp.ne.s32.totalorder %s106, %s107
      %p116 = scmp.eq.s32.totalorder %s26, 0
      %p117 = por %p115, %p116
      %p118 = scmp.ne.s32.totalorder %s106, %s107
      %p119 = scmp.eq.s32.totalorder %s27, 1
      %p120 = por %p118, %p119
      %p122 = scmp.ne.s32.totalorder %s107, %s121
      %p123 = scmp.eq.s32.totalorder %s27, 0
      %p124 = por %p122, %p123
      %s126 = sadd.s32 %s125, 1
      %p129 = scmp.eq.s32.totalorder %s21, 1
      %p130 = scmp.ne.s32.totalorder %s125, %s127
      %p131 = scmp.eq.s32.totalorder %s21, 0
      %p132 = por %p130, %p131
      %p133 = scmp.ne.s32.totalorder %s125, %s127
      %p134 = scmp.eq.s32.totalorder %s26, 1
      %p135 = por %p133, %p134
      %p136 = scmp.ne.s32.totalorder %s127, %s128
      %p137 = scmp.eq.s32.totalorder %s26, 0
      %p138 = por %p136, %p137
      %p139 = scmp.ne.s32.totalorder %s127, %s128
      %p140 = scmp.eq.s32.totalorder %s27, 1
      %p141 = por %p139, %p140
      %p143 = scmp.ne.s32.totalorder %s128, %s142
      %p144 = scmp.eq.s32.totalorder %s27, 0
      %p145 = por %p143, %p144
      %s147 = sadd.s32 %s146, 1
      %p150 = scmp.eq.s32.totalorder %s21, 1
      %p151 = scmp.ne.s32.totalorder %s146, %s148
      %p152 = scmp.eq.s32.totalorder %s21, 0
      %p153 = por %p151, %p152
      %p154 = scmp.ne.s32.totalorder %s146, %s148
      %p155 = scmp.eq.s32.totalorder %s26, 1
      %p156 = por %p154, %p155
      %p157 = scmp.ne.s32.totalorder %s148, %s149
      %p158 = scmp.eq.s32.totalorder %s26, 0
      %p159 = por %p157, %p158
      %p160 = scmp.ne.s32.totalorder %s148, %s149
      %p161 = scmp.eq.s32.totalorder %s27, 1
      %p162 = por %p160, %p161
      %p164 = scmp.ne.s32.totalorder %s149, %s163
      %p165 = scmp.eq.s32.totalorder %s27, 0
      %p166 = por %p164, %p165
      %s168 = sadd.s32 %s167, 1
      %p171 = scmp.eq.s32.totalorder %s21, 1
      %p172 = scmp.ne.s32.totalorder %s167, %s169
      %p173 = scmp.eq.s32.totalorder %s21, 0
      %p174 = por %p172, %p173
      %p175 = scmp.ne.s32.totalorder %s167, %s169
      %p176 = scmp.eq.s32.totalorder %s26, 1
      %p177 = por %p175, %p176
      %p178 = scmp.ne.s32.totalorder %s169, %s170
      %p179 = scmp.eq.s32.totalorder %s26, 0
      %p180 = por %p178, %p179
      %p181 = scmp.ne.s32.totalorder %s169, %s170
      %p182 = scmp.eq.s32.totalorder %s27, 1
      %p183 = por %p181, %p182
      %p185 = scmp.ne.s32.totalorder %s170, %s184
      %p186 = scmp.eq.s32.totalorder %s27, 0
      %p187 = por %p185, %p186
      %s189 = sadd.s32 %s188, 1
      %p192 = scmp.eq.s32.totalorder %s21, 1
      %p193 = scmp.ne.s32.totalorder %s188, %s190
      %p194 = scmp.eq.s32.totalorder %s21, 0
      %p195 = por %p193, %p194
      %p196 = scmp.ne.s32.totalorder %s188, %s190
      %p197 = scmp.eq.s32.totalorder %s26, 1
      %p198 = por %p196, %p197
      %p199 = scmp.ne.s32.totalorder %s190, %s191
      %p200 = scmp.eq.s32.totalorder %s26, 0
      %p201 = por %p199, %p200
      %p202 = scmp.ne.s32.totalorder %s190, %s191
      %p203 = scmp.eq.s32.totalorder %s27, 1
      %p204 = por %p202, %p203
      %p206 = scmp.ne.s32.totalorder %s191, %s205
      %p207 = scmp.eq.s32.totalorder %s27, 0
      %p208 = por %p206, %p207
      %s209 = ssub.s32 %s28, %s47
      %s210 = ssub.s32 %s29, %s43
      %s211 = sor.u32 %s209, %s210
      %s212 = ssub.s32 %s30, %s39
      %s213 = sor.u32 %s211, %s212
      %p214 = scmp.eq.s32.totalorder %s213, 0
      %s216 = sadd.s32 %s215, 1
      %s217 = scalar_select %p214, %s215, %s216
      %p220 = pneg %p214
      %p221 = scmp.eq.s32.totalorder %s21, 1
      %p222 = por %p220, %p221
      %p223 = scmp.ne.s32.totalorder %s215, %s218
      %p224 = scmp.eq.s32.totalorder %s21, 0
      %p225 = por %p223, %p224
      %p226 = scmp.ne.s32.totalorder %s215, %s218
      %p227 = scmp.eq.s32.totalorder %s26, 1
      %p228 = por %p226, %p227
      %p229 = scmp.ne.s32.totalorder %s218, %s219
      %p230 = scmp.eq.s32.totalorder %s26, 0
      %p231 = por %p229, %p230
      %p232 = scmp.ne.s32.totalorder %s218, %s219
      %p233 = scmp.eq.s32.totalorder %s27, 1
      %p234 = por %p232, %p233
      %p236 = scmp.ne.s32.totalorder %s219, %s235
      %p237 = scmp.eq.s32.totalorder %s27, 0
      %p238 = por %p236, %p237
      %p239 = scmp.le.s32.totalorder 1, %s21
      %p240 = scmp.lt.s32.totalorder %s21, 3
      %p241 = pnand %p239, %p240
      %p242 = pneg %p241
      // Predicated region
      $region9: #{tpu_custom_call.1} parent=5 // pred_check
        _
      $region10: #{tpu_custom_call.1} parent=5 // pred_check_branch
        %244 = sbr.rel (%p241) target = $region12
      $region11: #{tpu_custom_call.1} parent=5 // pred_region
        %s245 = ssub.s32 %s21, 1
        // Predicated region
        $region13: #{tpu_custom_call.1} parent=11 // pred_check
          %p246 = pneg %p117
        $region14: #{tpu_custom_call.1} parent=11 // pred_check_branch
          %248 = sbr.rel (%p246) target = $region16
        $region15: #{tpu_custom_call.1} parent=11 // pred_region
          %s250 = ssub.s32 512, 512
          %251 = vsyncadd [#allocation8], %s250
          %s252 = sshll.u32 [#allocation7], 4
          %s253 = int_to_ptr.vmem [resolvable:$true] %s252
          %258 = dma.hbm_to_vmem [thread:$0]  %s2, 512, %s253, [#allocation8], 128, 128, 8
        $region16: #{tpu_custom_call.1} parent=11 // pred_fallthru
          _
        // Predicated region
        $region17: #{tpu_custom_call.1} parent=11 // pred_check
          %p259 = pneg %p138
        $region18: #{tpu_custom_call.1} parent=11 // pred_check_branch
          %261 = sbr.rel (%p259) target = $region20
        $region19: #{tpu_custom_call.1} parent=11 // pred_region
          %s263 = ssub.s32 512, 512
          %264 = vsyncadd [#allocation8], %s263
          %s265 = sshll.u32 [#allocation9], 4
          %s266 = int_to_ptr.vmem [resolvable:$true] %s265
          %271 = dma.hbm_to_vmem [thread:$0]  %s3, 512, %s266, [#allocation8], 128, 128, 8
        $region20: #{tpu_custom_call.1} parent=11 // pred_fallthru
          _
        // Predicated region
        $region21: #{tpu_custom_call.1} parent=11 // pred_check
          %p272 = pneg %p159
        $region22: #{tpu_custom_call.1} parent=11 // pred_check_branch
          %274 = sbr.rel (%p272) target = $region24
        $region23: #{tpu_custom_call.1} parent=11 // pred_region
          _
        $region24: #{tpu_custom_call.1} parent=11 // pred_fallthru
          _
        // Predicated region
        $region25: #{tpu_custom_call.1} parent=11 // pred_check
          %p275 = pneg %p180
        $region26: #{tpu_custom_call.1} parent=11 // pred_check_branch
          %277 = sbr.rel (%p275) target = $region28
        $region27: #{tpu_custom_call.1} parent=11 // pred_region
          _
        $region28: #{tpu_custom_call.1} parent=11 // pred_fallthru
          _
        // Predicated region
        $region29: #{tpu_custom_call.1} parent=11 // pred_check
          %p278 = pneg %p201
        $region30: #{tpu_custom_call.1} parent=11 // pred_check_branch
          %280 = sbr.rel (%p278) target = $region32
        $region31: #{tpu_custom_call.1} parent=11 // pred_region
          _
        $region32: #{tpu_custom_call.1} parent=11 // pred_fallthru
          _
      $region12: #{tpu_custom_call.1} parent=5 // pred_fallthru
        _
      %p281 = scmp.lt.s32.totalorder %s21, 2
      // Predicated region
      $region33: #{tpu_custom_call.1} parent=5 // pred_check
        %p282 = pneg %p281
      $region34: #{tpu_custom_call.1} parent=5 // pred_check_branch
        %284 = sbr.rel (%p282) target = $region36
      $region35: #{tpu_custom_call.1} parent=5 // pred_region
        // Predicated region
        $region37: #{tpu_custom_call.1} parent=35 // pred_check
          %p285 = pneg %p62
        $region38: #{tpu_custom_call.1} parent=35 // pred_check_branch
          %287 = sbr.rel (%p285) target = $region40
        $region39: #{tpu_custom_call.1} parent=35 // pred_region
          %s288 = sand.u32 %s52, 1
          %s289 = scalar_lea.sflag [#allocation5], %s288
          %s290 = sand.u32 %s52, 1
          %s291 = smul.addr %s290, 8
          %s292 = scalar_lea.vmem [#allocation4], %s291
          %s294 = ssub.s32 128, 128
          %295 = vsyncadd %s289, %s294
          %s296 = sadd.s32 %s29, %s28
          %s297 = smul.addr %s296, 128
          %s298 = scalar_lea.hbm %s0, %s297
          %s300 = sshll.u32 %s292, 4
          %s301 = int_to_ptr.vmem [resolvable:$true] %s300
          %303 = dma.hbm_to_vmem [thread:$0]  %s298, 128, %s301, %s289
        $region40: #{tpu_custom_call.1} parent=35 // pred_fallthru
          _
        // Predicated region
        $region41: #{tpu_custom_call.1} parent=35 // pred_check
          %p304 = pneg %p90
        $region42: #{tpu_custom_call.1} parent=35 // pred_check_branch
          %306 = sbr.rel (%p304) target = $region44
        $region43: #{tpu_custom_call.1} parent=35 // pred_region
          %p307 = scmp.lt.s32.totalorder %s28, 1
          %s308 = scalar_select %p307, %s28, 1
          %p309 = scmp.lt.s32.totalorder %s30, 0
          %s310 = scalar_select %p309, %s30, 0
          %s311 = smul.addr %s308, 4
          %s312 = sadd.s32 %s310, %s311
          %s313 = smul.addr %s312, 8
          %s314 = scalar_lea.vmem %s1, %s313
        $region44: #{tpu_custom_call.1} parent=35 // pred_fallthru
          _
      $region36: #{tpu_custom_call.1} parent=5 // pred_fallthru
        _
      %p315 = scmp.le.s32.totalorder 1, %s21
      %p316 = scmp.lt.s32.totalorder %s21, 3
      %p317 = pnand %p315, %p316
      %p318 = pneg %p317
      // Predicated region
      $region45: #{tpu_custom_call.1} parent=5 // pred_check
        _
      $region46: #{tpu_custom_call.1} parent=5 // pred_check_branch
        %320 = sbr.rel (%p317) target = $region48
      $region47: #{tpu_custom_call.1} parent=5 // pred_region
        %s321 = ssub.s32 %s21, 1
        %s322 = sand.u32 %s55, 1
        %s323 = scalar_lea.sflag [#allocation5], %s322
        %s324 = sand.u32 %s55, 1
        %s325 = smul.addr %s324, 8
        %s326 = scalar_lea.vmem [#allocation4], %s325
        // Predicated region
        $region49: #{tpu_custom_call.1} parent=47 // pred_check
          %p327 = pneg %p68
        $region50: #{tpu_custom_call.1} parent=47 // pred_check_branch
          %329 = sbr.rel (%p327) target = $region52
        $region51: #{tpu_custom_call.1} parent=47 // pred_region
          %330 = dma.done %s323, 128
        $region52: #{tpu_custom_call.1} parent=47 // pred_fallthru
          _
        // Predicated region
        $region53: #{tpu_custom_call.1} parent=47 // pred_check
          %p331 = pneg %p117
        $region54: #{tpu_custom_call.1} parent=47 // pred_check_branch
          %333 = sbr.rel (%p331) target = $region56
        $region55: #{tpu_custom_call.1} parent=47 // pred_region
          %334 = dma.done [#allocation8], 512
        $region56: #{tpu_custom_call.1} parent=47 // pred_fallthru
          _
        // Predicated region
        $region57: #{tpu_custom_call.1} parent=47 // pred_check
          %p335 = pneg %p138
        $region58: #{tpu_custom_call.1} parent=47 // pred_check_branch
          %337 = sbr.rel (%p335) target = $region60
        $region59: #{tpu_custom_call.1} parent=47 // pred_region
          %338 = dma.done [#allocation8], 512
        $region60: #{tpu_custom_call.1} parent=47 // pred_fallthru
          _
        %s339 = sand.u32 %s55, 1
        %s340 = scalar_lea.sflag [#allocation5], %s339
        %s341 = sand.u32 %s55, 1
        %s342 = smul.addr %s341, 8
        %s343 = scalar_lea.vmem [#allocation4], %s342
        %p344 = pneg %p68
        %p345 = pneg %p65
        %p346 = scmp.lt.s32.totalorder %s31, 1
        %s347 = scalar_select %p346, %s31, 1
        %p348 = scmp.lt.s32.totalorder %s33, 0
        %s349 = scalar_select %p348, %s33, 0
        %s350 = smul.addr %s347, 4
        %s351 = sadd.s32 %s349, %s350
        %s352 = smul.addr %s351, 8
        %s353 = scalar_lea.vmem %s1, %s352
        %p354 = pneg %p96
        %p355 = pneg %p93
        %p356 = pneg %p117
        %p357 = pneg %p114
        %p358 = pneg %p138
        %p359 = pneg %p135
        %p360 = pneg %p159
        %p361 = pneg %p156
        %p362 = pneg %p180
        %p363 = pneg %p177
        %p364 = pneg %p201
        %p365 = pneg %p198
        %p366 = pneg %p231
        %p367 = pneg %p228
        %s368 = sand.u32 %s218, 1
        %s369 = scalar_lea.sflag [#allocation6], %s368
        %s370 = sand.u32 %s218, 1
        %s371 = smul.addr %s370, 8
        %s372 = scalar_lea.vmem [#allocation10], %s371
        %p373 = scmp.lt.s32.totalorder %s31, 1
        %s374 = scalar_select %p373, %s31, 1
        %p375 = scmp.lt.s32.totalorder %s33, 0
        %s376 = scalar_select %p375, %s33, 0
        %s377 = smul.addr %s374, 4
        %s378 = sadd.s32 %s376, %s377
        %s379 = smul.addr %s378, 8
        %s380 = scalar_lea.vmem %s1, %s379
        %p381 = scmp.eq.s32.totalorder %s33, 0
        // Predicated region
        $region61: #{tpu_custom_call.1} parent=47 // pred_check
          %p382 = pneg %p381
        $region62: #{tpu_custom_call.1} parent=47 // pred_check_branch
          %384 = sbr.rel (%p382) target = $region64
        $region63: #{tpu_custom_call.1} parent=47 // pred_region
          %v385 = vld [vmem:[%s326] sm:$0xff]
          %v386 = vld [vmem:[#allocation7] sm:$0xff]
          %v387 = vld [vmem:[#allocation7 + $0x8] sm:$0xff]
          %v388 = vld [vmem:[#allocation7 + $0x10] sm:$0xff]
          %v389 = vld [vmem:[#allocation7 + $0x18] sm:$0xff]
          %vm390 = vcmask 261120
          %v392 = vsel %vm390, %v385, 0
          %394 = vmatprep.subr.mxu0 0.0
          %395 = vmatpush1.msra.mxu0 %v386
          %396 = vmatprep.subr.mxu0 0.0
          %397 = vmatpush1.msra.mxu0 %v387
          %398 = vmatprep.subr.mxu0 0.0
          %399 = vmatpush1.msra.mxu0 %v388
          %400 = vmatprep.subr.mxu0 0.0
          %401 = vmatpush1.msra.mxu0 %v389
          %402 = vmatprep.subr.mxu0 0.0
          %403 = vmatpush1.msra.mxu0 0.0
          %404 = vmatprep.subr.mxu0 0.0
          %405 = vmatpush1.msra.mxu0 0.0
          %406 = vmatprep.subr.mxu0 0.0
          %407 = vmatpush1.msra.mxu0 0.0
          %408 = vmatprep.subr.mxu0 0.0
          %409 = vmatpush1.msra.mxu0 0.0
          %410 = vmatprep.subr.mxu0 0.0
          %411 = vmatpush1.msra.mxu0 0.0
          %412 = vmatprep.subr.mxu0 0.0
          %413 = vmatpush1.msra.mxu0 0.0
          %414 = vmatprep.subr.mxu0 0.0
          %415 = vmatpush1.msra.mxu0 0.0
          %416 = vmatprep.subr.mxu0 0.0
          %417 = vmatpush1.msra.mxu0 0.0
          %418 = vmatprep.subr.mxu0 0.0
          %419 = vmatpush1.msra.mxu0 0.0
          %420 = vmatprep.subr.mxu0 0.0
          %421 = vmatpush1.msra.mxu0 0.0
          %422 = vmatprep.subr.mxu0 0.0
          %423 = vmatpush1.msra.mxu0 0.0
          %424 = vmatprep.subr.mxu0 0.0
          %425 = vmatpush1.msra.mxu0 0.0
          %426 = vmatprep.subr.mxu0 0.0
          %427 = vmatpush1.msra.mxu0 0.0
          %428 = vmatprep.subr.mxu0 0.0
          %429 = vmatpush1.msra.mxu0 0.0
          %430 = vmatprep.subr.mxu0 0.0
          %431 = vmatpush1.msra.mxu0 0.0
          %432 = vmatprep.subr.mxu0 0.0
          %433 = vmatpush1.msra.mxu0 0.0
          %434 = vmatprep.subr.mxu0 0.0
          %435 = vmatpush1.msra.mxu0 0.0
          %436 = vmatprep.subr.mxu0 0.0
          %437 = vmatpush1.msra.mxu0 0.0
          %438 = vmatprep.subr.mxu0 0.0
          %439 = vmatpush1.msra.mxu0 0.0
          %440 = vmatprep.subr.mxu0 0.0
          %441 = vmatpush1.msra.mxu0 0.0
          %442 = vmatprep.subr.mxu0 0.0
          %443 = vmatpush1.msra.mxu0 0.0
          %444 = vmatprep.subr.mxu0 0.0
          %445 = vmatpush1.msra.mxu0 0.0
          %446 = vmatprep.subr.mxu0 0.0
          %447 = vmatpush1.msra.mxu0 0.0
          %448 = vmatprep.subr.mxu0 0.0
          %449 = vmatpush1.msra.mxu0 0.0
          %450 = vmatprep.subr.mxu0 0.0
          %451 = vmatpush1.msra.mxu0 0.0
          %452 = vmatprep.subr.mxu0 0.0
          %453 = vmatpush1.msra.mxu0 0.0
          %454 = vmatprep.subr.mxu0 0.0
          %455 = vmatpush1.msra.mxu0 0.0
          %456 = vmatprep.subr.mxu0 0.0
          %457 = vmatpush1.msra.mxu0 0.0
          %458 = vmatprep.mubr.f32.mxu0 0.0
          %459 = vmatmul.mubr.f32.gmra.mrb[0].mxu0 %v392
          %v460 = vpop.f32.mrb[0].mxu0
          %v461 = vadd.f32 0.0, %v460
          %v462 = vpop.f32.mrb[0].mxu0
          %463 = vdwg.mxu0
          %464 = vst.msk [vmem:[#allocation2] sm:$0xff] %vm390, %v461
        $region64: #{tpu_custom_call.1} parent=47 // pred_fallthru
          _
        %v465 = vld [vmem:[#allocation9] sm:$0xff]
        %v466 = vld [vmem:[#allocation9 + $0x8] sm:$0xff]
        %v467 = vld [vmem:[#allocation9 + $0x10] sm:$0xff]
        %v468 = vld [vmem:[#allocation9 + $0x18] sm:$0xff]
        %v469 = vld [vmem:[%s380] sm:$0xff]
        %v470 = vld [vmem:[%s380 + $0x8] sm:$0xff]
        %v471 = vld [vmem:[%s380 + $0x10] sm:$0xff]
        %v472 = vld [vmem:[%s380 + $0x18] sm:$0xff]
        %v473 = vld [vmem:[%s4] sm:$0xff]
        %v474 = vld [vmem:[%s4 + $0x8] sm:$0xff]
        %v475 = vld [vmem:[%s4 + $0x10] sm:$0xff]
        %v476 = vld [vmem:[%s4 + $0x18] sm:$0xff]
        %478 = vset.pattern.permute.xlu0 0
        %479 = vperm.xlu0 %478, %v473
        %v480 = vpop.permute.xlu0 %479
        %483 = vset.pattern.permute.xlu0 0
        %484 = vperm.xlu0 %483, %v474
        %v485 = vpop.permute.xlu0 %484
        %488 = vset.pattern.permute.xlu0 0
        %489 = vperm.xlu0 %488, %v475
        %v490 = vpop.permute.xlu0 %489
        %493 = vset.pattern.permute.xlu0 0
        %494 = vperm.xlu0 %493, %v476
        %v495 = vpop.permute.xlu0 %494
        %vm497 = vcmask 261120
        %v499 = vsel %vm497, %v465, 0
        %v502 = vsel %vm497, %v466, 0
        %v505 = vsel %vm497, %v467, 0
        %v508 = vsel %vm497, %v468, 0
        %510 = vmatprep.subr.mxu0 0.0
        %511 = vmatpush1.msra.mxu0 %v469
        %512 = vmatprep.subr.mxu0 0.0
        %513 = vmatpush1.msra.mxu0 %v470
        %514 = vmatprep.subr.mxu0 0.0
        %515 = vmatpush1.msra.mxu0 %v471
        %516 = vmatprep.subr.mxu0 0.0
        %517 = vmatpush1.msra.mxu0 %v472
        %518 = vmatprep.subr.mxu0 0.0
        %519 = vmatpush1.msra.mxu0 0.0
        %520 = vmatprep.subr.mxu0 0.0
        %521 = vmatpush1.msra.mxu0 0.0
        %522 = vmatprep.subr.mxu0 0.0
        %523 = vmatpush1.msra.mxu0 0.0
        %524 = vmatprep.subr.mxu0 0.0
        %525 = vmatpush1.msra.mxu0 0.0
        %526 = vmatprep.subr.mxu0 0.0
        %527 = vmatpush1.msra.mxu0 0.0
        %528 = vmatprep.subr.mxu0 0.0
        %529 = vmatpush1.msra.mxu0 0.0
        %530 = vmatprep.subr.mxu0 0.0
        %531 = vmatpush1.msra.mxu0 0.0
        %532 = vmatprep.subr.mxu0 0.0
        %533 = vmatpush1.msra.mxu0 0.0
        %534 = vmatprep.subr.mxu0 0.0
        %535 = vmatpush1.msra.mxu0 0.0
        %536 = vmatprep.subr.mxu0 0.0
        %537 = vmatpush1.msra.mxu0 0.0
        %538 = vmatprep.subr.mxu0 0.0
        %539 = vmatpush1.msra.mxu0 0.0
        %540 = vmatprep.subr.mxu0 0.0
        %541 = vmatpush1.msra.mxu0 0.0
        %542 = vmatprep.subr.mxu0 0.0
        %543 = vmatpush1.msra.mxu0 0.0
        %544 = vmatprep.subr.mxu0 0.0
        %545 = vmatpush1.msra.mxu0 0.0
        %546 = vmatprep.subr.mxu0 0.0
        %547 = vmatpush1.msra.mxu0 0.0
        %548 = vmatprep.subr.mxu0 0.0
        %549 = vmatpush1.msra.mxu0 0.0
        %550 = vmatprep.subr.mxu0 0.0
        %551 = vmatpush1.msra.mxu0 0.0
        %552 = vmatprep.subr.mxu0 0.0
        %553 = vmatpush1.msra.mxu0 0.0
        %554 = vmatprep.subr.mxu0 0.0
        %555 = vmatpush1.msra.mxu0 0.0
        %556 = vmatprep.subr.mxu0 0.0
        %557 = vmatpush1.msra.mxu0 0.0
        %558 = vmatprep.subr.mxu0 0.0
        %559 = vmatpush1.msra.mxu0 0.0
        %560 = vmatprep.subr.mxu0 0.0
        %561 = vmatpush1.msra.mxu0 0.0
        %562 = vmatprep.subr.mxu0 0.0
        %563 = vmatpush1.msra.mxu0 0.0
        %564 = vmatprep.subr.mxu0 0.0
        %565 = vmatpush1.msra.mxu0 0.0
        %566 = vmatprep.subr.mxu0 0.0
        %567 = vmatpush1.msra.mxu0 0.0
        %568 = vmatprep.subr.mxu0 0.0
        %569 = vmatpush1.msra.mxu0 0.0
        %570 = vmatprep.subr.mxu0 0.0
        %571 = vmatpush1.msra.mxu0 0.0
        %572 = vmatprep.subr.mxu0 0.0
        %573 = vmatpush1.msra.mxu0 0.0
        %574 = vmatprep.mubr.f32.mxu0 0.0
        %575 = vmatmul.mubr.f32.gmra.mrb[0].mxu0 %v499
        %v576 = vpop.f32.mrb[0].mxu0
        %v577 = vadd.f32 %v480, %v576
        %v578 = vpop.f32.mrb[0].mxu0
        %579 = vmatprep.mubr.f32.mxu0 0.0
        %580 = vmatmul.mubr.f32.gmra.mrb[0].mxu0 %v502
        %v581 = vpop.f32.mrb[0].mxu0
        %v582 = vadd.f32 %v485, %v581
        %v583 = vpop.f32.mrb[0].mxu0
        %584 = vmatprep.mubr.f32.mxu0 0.0
        %585 = vmatmul.mubr.f32.gmra.mrb[0].mxu0 %v505
        %v586 = vpop.f32.mrb[0].mxu0
        %v587 = vadd.f32 %v490, %v586
        %v588 = vpop.f32.mrb[0].mxu0
        %589 = vmatprep.mubr.f32.mxu0 0.0
        %590 = vmatmul.mubr.f32.gmra.mrb[0].mxu0 %v508
        %v591 = vpop.f32.mrb[0].mxu0
        %v592 = vadd.f32 %v495, %v591
        %v593 = vpop.f32.mrb[0].mxu0
        %594 = vdwg.mxu0
        %v595 = vld [vmem:[#allocation2] sm:$0xff]
        %v596 = vlaneseq
        %v597 = vshrl.u32 %v596, 7
        %v598 = vsub.s32 0, %v597
        %v599 = vrot.slane %v595, %v598
        %601 = vbcast.lane.b32.xlu0 %v599, 256
        %v602 = vpop.permute.xlu0 %601
        %s604 = sor.u32 256, 8
        %605 = vbcast.lane.b32.xlu0 %v599, %s604
        %v606 = vpop.permute.xlu0 %605
        %s608 = sor.u32 256, 16
        %609 = vbcast.lane.b32.xlu0 %v599, %s608
        %v610 = vpop.permute.xlu0 %609
        %s612 = sor.u32 256, 24
        %613 = vbcast.lane.b32.xlu0 %v599, %s612
        %v614 = vpop.permute.xlu0 %613
        %v615 = vlaneseq
        %v616 = vshrl.u32 %v615, 7
        %v617 = vsub.s32 1, %v616
        %v618 = vrot.slane %v595, %v617
        %620 = vbcast.lane.b32.xlu0 %v618, 256
        %v621 = vpop.permute.xlu0 %620
        %s623 = sor.u32 256, 8
        %624 = vbcast.lane.b32.xlu0 %v618, %s623
        %v625 = vpop.permute.xlu0 %624
        %s627 = sor.u32 256, 16
        %628 = vbcast.lane.b32.xlu0 %v618, %s627
        %v629 = vpop.permute.xlu0 %628
        %s631 = sor.u32 256, 24
        %632 = vbcast.lane.b32.xlu0 %v618, %s631
        %v633 = vpop.permute.xlu0 %632
        %v634 = vlaneseq
        %v635 = vshrl.u32 %v634, 7
        %v636 = vsub.s32 2, %v635
        %v637 = vrot.slane %v595, %v636
        %639 = vbcast.lane.b32.xlu0 %v637, 256
        %v640 = vpop.permute.xlu0 %639
        %s642 = sor.u32 256, 8
        %643 = vbcast.lane.b32.xlu0 %v637, %s642
        %v644 = vpop.permute.xlu0 %643
        %s646 = sor.u32 256, 16
        %647 = vbcast.lane.b32.xlu0 %v637, %s646
        %v648 = vpop.permute.xlu0 %647
        %s650 = sor.u32 256, 24
        %651 = vbcast.lane.b32.xlu0 %v637, %s650
        %v652 = vpop.permute.xlu0 %651
        %v653 = vlaneseq
        %v654 = vshrl.u32 %v653, 7
        %v655 = vsub.s32 3, %v654
        %v656 = vrot.slane %v595, %v655
        %658 = vbcast.lane.b32.xlu0 %v656, 256
        %v659 = vpop.permute.xlu0 %658
        %s661 = sor.u32 256, 8
        %662 = vbcast.lane.b32.xlu0 %v656, %s661
        %v663 = vpop.permute.xlu0 %662
        %s665 = sor.u32 256, 16
        %666 = vbcast.lane.b32.xlu0 %v656, %s665
        %v667 = vpop.permute.xlu0 %666
        %s669 = sor.u32 256, 24
        %670 = vbcast.lane.b32.xlu0 %v656, %s669
        %v671 = vpop.permute.xlu0 %670
        %v672 = vlaneseq
        %v673 = vshrl.u32 %v672, 7
        %v674 = vsub.s32 4, %v673
        %v675 = vrot.slane %v595, %v674
        %677 = vbcast.lane.b32.xlu0 %v675, 256
        %v678 = vpop.permute.xlu0 %677
        %s680 = sor.u32 256, 8
        %681 = vbcast.lane.b32.xlu0 %v675, %s680
        %v682 = vpop.permute.xlu0 %681
        %s684 = sor.u32 256, 16
        %685 = vbcast.lane.b32.xlu0 %v675, %s684
        %v686 = vpop.permute.xlu0 %685
        %s688 = sor.u32 256, 24
        %689 = vbcast.lane.b32.xlu0 %v675, %s688
        %v690 = vpop.permute.xlu0 %689
        %v691 = vlaneseq
        %v692 = vshrl.u32 %v691, 7
        %v693 = vsub.s32 5, %v692
        %v694 = vrot.slane %v595, %v693
        %696 = vbcast.lane.b32.xlu0 %v694, 256
        %v697 = vpop.permute.xlu0 %696
        %s699 = sor.u32 256, 8
        %700 = vbcast.lane.b32.xlu0 %v694, %s699
        %v701 = vpop.permute.xlu0 %700
        %s703 = sor.u32 256, 16
        %704 = vbcast.lane.b32.xlu0 %v694, %s703
        %v705 = vpop.permute.xlu0 %704
        %s707 = sor.u32 256, 24
        %708 = vbcast.lane.b32.xlu0 %v694, %s707
        %v709 = vpop.permute.xlu0 %708
        %v710 = vlaneseq
        %v711 = vshrl.u32 %v710, 7
        %v712 = vsub.s32 6, %v711
        %v713 = vrot.slane %v595, %v712
        %715 = vbcast.lane.b32.xlu0 %v713, 256
        %v716 = vpop.permute.xlu0 %715
        %s718 = sor.u32 256, 8
        %719 = vbcast.lane.b32.xlu0 %v713, %s718
        %v720 = vpop.permute.xlu0 %719
        %s722 = sor.u32 256, 16
        %723 = vbcast.lane.b32.xlu0 %v713, %s722
        %v724 = vpop.permute.xlu0 %723
        %s726 = sor.u32 256, 24
        %727 = vbcast.lane.b32.xlu0 %v713, %s726
        %v728 = vpop.permute.xlu0 %727
        %v729 = vlaneseq
        %v730 = vshrl.u32 %v729, 7
        %v731 = vsub.s32 7, %v730
        %v732 = vrot.slane %v595, %v731
        %734 = vbcast.lane.b32.xlu0 %v732, 256
        %v735 = vpop.permute.xlu0 %734
        %s737 = sor.u32 256, 8
        %738 = vbcast.lane.b32.xlu0 %v732, %s737
        %v739 = vpop.permute.xlu0 %738
        %s741 = sor.u32 256, 16
        %742 = vbcast.lane.b32.xlu0 %v732, %s741
        %v743 = vpop.permute.xlu0 %742
        %s745 = sor.u32 256, 24
        %746 = vbcast.lane.b32.xlu0 %v732, %s745
        %v747 = vpop.permute.xlu0 %746
        %v748 = vadd.f32 %v602, %v577
        %v749 = vadd.f32 %v606, %v582
        %v750 = vadd.f32 %v610, %v587
        %v751 = vadd.f32 %v614, %v592
        %v752 = vadd.f32 %v621, %v577
        %v753 = vadd.f32 %v625, %v582
        %v754 = vadd.f32 %v629, %v587
        %v755 = vadd.f32 %v633, %v592
        %v756 = vadd.f32 %v640, %v577
        %v757 = vadd.f32 %v644, %v582
        %v758 = vadd.f32 %v648, %v587
        %v759 = vadd.f32 %v652, %v592
        %v760 = vadd.f32 %v659, %v577
        %v761 = vadd.f32 %v663, %v582
        %v762 = vadd.f32 %v667, %v587
        %v763 = vadd.f32 %v671, %v592
        %v764 = vadd.f32 %v678, %v577
        %v765 = vadd.f32 %v682, %v582
        %v766 = vadd.f32 %v686, %v587
        %v767 = vadd.f32 %v690, %v592
        %v768 = vadd.f32 %v697, %v577
        %v769 = vadd.f32 %v701, %v582
        %v770 = vadd.f32 %v705, %v587
        %v771 = vadd.f32 %v709, %v592
        %v772 = vadd.f32 %v716, %v577
        %v773 = vadd.f32 %v720, %v582
        %v774 = vadd.f32 %v724, %v587
        %v775 = vadd.f32 %v728, %v592
        %v776 = vadd.f32 %v735, %v577
        %v777 = vadd.f32 %v739, %v582
        %v778 = vadd.f32 %v743, %v587
        %v779 = vadd.f32 %v747, %v592
        %v780 = vtanh.pop %v748
        %v781 = vtanh.pop %v749
        %v782 = vtanh.pop %v750
        %v783 = vtanh.pop %v751
        %v784 = vtanh.pop %v752
        %v785 = vtanh.pop %v753
        %v786 = vtanh.pop %v754
        %v787 = vtanh.pop %v755
        %v788 = vtanh.pop %v756
        %v789 = vtanh.pop %v757
        %v790 = vtanh.pop %v758
        %v791 = vtanh.pop %v759
        %v792 = vtanh.pop %v760
        %v793 = vtanh.pop %v761
        %v794 = vtanh.pop %v762
        %v795 = vtanh.pop %v763
        %v796 = vtanh.pop %v764
        %v797 = vtanh.pop %v765
        %v798 = vtanh.pop %v766
        %v799 = vtanh.pop %v767
        %v800 = vtanh.pop %v768
        %v801 = vtanh.pop %v769
        %v802 = vtanh.pop %v770
        %v803 = vtanh.pop %v771
        %v804 = vtanh.pop %v772
        %v805 = vtanh.pop %v773
        %v806 = vtanh.pop %v774
        %v807 = vtanh.pop %v775
        %v808 = vtanh.pop %v776
        %v809 = vtanh.pop %v777
        %v810 = vtanh.pop %v778
        %v811 = vtanh.pop %v779
        %v812 = vld [vmem:[%s5] sm:$0xff]
        %v813 = vld [vmem:[%s5 + $0x8] sm:$0xff]
        %v814 = vld [vmem:[%s5 + $0x10] sm:$0xff]
        %v815 = vld [vmem:[%s5 + $0x18] sm:$0xff]
        %817 = vset.pattern.permute.xlu0 0
        %818 = vperm.xlu0 %817, %v812
        %v819 = vpop.permute.xlu0 %818
        %822 = vset.pattern.permute.xlu0 0
        %823 = vperm.xlu0 %822, %v813
        %v824 = vpop.permute.xlu0 %823
        %827 = vset.pattern.permute.xlu0 0
        %828 = vperm.xlu0 %827, %v814
        %v829 = vpop.permute.xlu0 %828
        %832 = vset.pattern.permute.xlu0 0
        %833 = vperm.xlu0 %832, %v815
        %v834 = vpop.permute.xlu0 %833
        %v836 = vmul.f32 %v780, %v819
        %v837 = vmul.f32 %v781, %v824
        %v838 = vmul.f32 %v782, %v829
        %v839 = vmul.f32 %v783, %v834
        %v840 = vmul.f32 %v784, %v819
        %v841 = vmul.f32 %v785, %v824
        %v842 = vmul.f32 %v786, %v829
        %v843 = vmul.f32 %v787, %v834
        %v844 = vmul.f32 %v788, %v819
        %v845 = vmul.f32 %v789, %v824
        %v846 = vmul.f32 %v790, %v829
        %v847 = vmul.f32 %v791, %v834
        %v848 = vmul.f32 %v792, %v819
        %v849 = vmul.f32 %v793, %v824
        %v850 = vmul.f32 %v794, %v829
        %v851 = vmul.f32 %v795, %v834
        %v852 = vmul.f32 %v796, %v819
        %v853 = vmul.f32 %v797, %v824
        %v854 = vmul.f32 %v798, %v829
        %v855 = vmul.f32 %v799, %v834
        %v856 = vmul.f32 %v800, %v819
        %v857 = vmul.f32 %v801, %v824
        %v858 = vmul.f32 %v802, %v829
        %v859 = vmul.f32 %v803, %v834
        %v860 = vmul.f32 %v804, %v819
        %v861 = vmul.f32 %v805, %v824
        %v862 = vmul.f32 %v806, %v829
        %v863 = vmul.f32 %v807, %v834
        %v864 = vmul.f32 %v808, %v819
        %v865 = vmul.f32 %v809, %v824
        %v866 = vmul.f32 %v810, %v829
        %v867 = vmul.f32 %v811, %v834
        %v868 = vadd.f32 %v836, %v837
        %v869 = vadd.f32 %v868, %v838
        %v870 = vadd.f32 %v869, %v839
        %v871 = vrot.slane %v870, 4
        %v872 = vadd.f32 %v870, %v871
        %v873 = vrot.slane %v872, 2
        %v874 = vadd.f32 %v872, %v873
        %v875 = vrot.slane %v874, 1
        %v876 = vadd.f32 %v874, %v875
        %v877 = vadd.f32 %v840, %v841
        %v878 = vadd.f32 %v877, %v842
        %v879 = vadd.f32 %v878, %v843
        %v880 = vrot.slane %v879, 4
        %v881 = vadd.f32 %v879, %v880
        %v882 = vrot.slane %v881, 2
        %v883 = vadd.f32 %v881, %v882
        %v884 = vrot.slane %v883, 1
        %v885 = vadd.f32 %v883, %v884
        %v886 = vadd.f32 %v844, %v845
        %v887 = vadd.f32 %v886, %v846
        %v888 = vadd.f32 %v887, %v847
        %v889 = vrot.slane %v888, 4
        %v890 = vadd.f32 %v888, %v889
        %v891 = vrot.slane %v890, 2
        %v892 = vadd.f32 %v890, %v891
        %v893 = vrot.slane %v892, 1
        %v894 = vadd.f32 %v892, %v893
        %v895 = vadd.f32 %v848, %v849
        %v896 = vadd.f32 %v895, %v850
        %v897 = vadd.f32 %v896, %v851
        %v898 = vrot.slane %v897, 4
        %v899 = vadd.f32 %v897, %v898
        %v900 = vrot.slane %v899, 2
        %v901 = vadd.f32 %v899, %v900
        %v902 = vrot.slane %v901, 1
        %v903 = vadd.f32 %v901, %v902
        %v904 = vadd.f32 %v852, %v853
        %v905 = vadd.f32 %v904, %v854
        %v906 = vadd.f32 %v905, %v855
        %v907 = vrot.slane %v906, 4
        %v908 = vadd.f32 %v906, %v907
        %v909 = vrot.slane %v908, 2
        %v910 = vadd.f32 %v908, %v909
        %v911 = vrot.slane %v910, 1
        %v912 = vadd.f32 %v910, %v911
        %v913 = vadd.f32 %v856, %v857
        %v914 = vadd.f32 %v913, %v858
        %v915 = vadd.f32 %v914, %v859
        %v916 = vrot.slane %v915, 4
        %v917 = vadd.f32 %v915, %v916
        %v918 = vrot.slane %v917, 2
        %v919 = vadd.f32 %v917, %v918
        %v920 = vrot.slane %v919, 1
        %v921 = vadd.f32 %v919, %v920
        %v922 = vadd.f32 %v860, %v861
        %v923 = vadd.f32 %v922, %v862
        %v924 = vadd.f32 %v923, %v863
        %v925 = vrot.slane %v924, 4
        %v926 = vadd.f32 %v924, %v925
        %v927 = vrot.slane %v926, 2
        %v928 = vadd.f32 %v926, %v927
        %v929 = vrot.slane %v928, 1
        %v930 = vadd.f32 %v928, %v929
        %v931 = vadd.f32 %v864, %v865
        %v932 = vadd.f32 %v931, %v866
        %v933 = vadd.f32 %v932, %v867
        %v934 = vrot.slane %v933, 4
        %v935 = vadd.f32 %v933, %v934
        %v936 = vrot.slane %v935, 2
        %v937 = vadd.f32 %v935, %v936
        %v938 = vrot.slane %v937, 1
        %v939 = vadd.f32 %v937, %v938
        %s940 = sld [smem:[#allocation3]]
        %v941 = vstv %s940
        %v942 = vadd.f32 %v876, %v941
        %v943 = vadd.f32 %v885, %v941
        %v944 = vadd.f32 %v894, %v941
        %v945 = vadd.f32 %v903, %v941
        %v946 = vadd.f32 %v912, %v941
        %v947 = vadd.f32 %v921, %v941
        %v948 = vadd.f32 %v930, %v941
        %v949 = vadd.f32 %v939, %v941
        %v950 = vtanh.pop %v942
        %v951 = vtanh.pop %v943
        %v952 = vtanh.pop %v944
        %v953 = vtanh.pop %v945
        %v954 = vtanh.pop %v946
        %v955 = vtanh.pop %v947
        %v956 = vtanh.pop %v948
        %v957 = vtanh.pop %v949
        %vm966 = vcmask 1041409
        %v967 = vsel %vm966, %v951, %v950
        %vm968 = vcmask 1042434
        %v969 = vsel %vm968, %v952, %v967
        %vm970 = vcmask 1043459
        %v971 = vsel %vm970, %v953, %v969
        %vm972 = vcmask 1044484
        %v973 = vsel %vm972, %v954, %v971
        %vm974 = vcmask 1045509
        %v975 = vsel %vm974, %v955, %v973
        %vm976 = vcmask 1046534
        %v977 = vsel %vm976, %v956, %v975
        %vm978 = vcmask 1047559
        %v979 = vsel %vm978, %v957, %v977
        %981 = vst [vmem:[%s372] sm:$0xff] %v979
        %s982 = sand.u32 %s218, 1
        %s983 = scalar_lea.sflag [#allocation6], %s982
        %s984 = sand.u32 %s218, 1
        %s985 = smul.addr %s984, 8
        %s986 = scalar_lea.vmem [#allocation10], %s985
        // Predicated region
        $region65: #{tpu_custom_call.1} parent=47 // pred_check
          %p987 = pneg %p228
        $region66: #{tpu_custom_call.1} parent=47 // pred_check_branch
          %989 = sbr.rel (%p987) target = $region68
        $region67: #{tpu_custom_call.1} parent=47 // pred_region
          %s991 = ssub.s32 128, 128
          %992 = vsyncadd %s983, %s991
          %s993 = sadd.s32 %s33, %s32
          %s994 = sadd.s32 %s993, %s31
          %s995 = smul.addr %s994, 128
          %s996 = scalar_lea.hbm %s7, %s995
          %s998 = sshll.u32 %s986, 4
          %s999 = int_to_ptr.vmem [resolvable:$true] %s998
          %1001 = dma.vmem_to_hbm [thread:$0]  %s999, 128, %s996, %s983
        $region68: #{tpu_custom_call.1} parent=47 // pred_fallthru
          _
      $region48: #{tpu_custom_call.1} parent=5 // pred_fallthru
        _
      %p1002 = scmp.le.s32.totalorder 2, %s21
      // Predicated region
      $region69: #{tpu_custom_call.1} parent=5 // pred_check
        %p1003 = pneg %p1002
      $region70: #{tpu_custom_call.1} parent=5 // pred_check_branch
        %1005 = sbr.rel (%p1003) target = $region72
      $region71: #{tpu_custom_call.1} parent=5 // pred_region
        %s1006 = ssub.s32 %s21, 2
        // Predicated region
        $region73: #{tpu_custom_call.1} parent=71 // pred_check
          %p1007 = pneg %p234
        $region74: #{tpu_custom_call.1} parent=71 // pred_check_branch
          %1009 = sbr.rel (%p1007) target = $region76
        $region75: #{tpu_custom_call.1} parent=71 // pred_region
          %s1010 = sand.u32 %s219, 1
          %s1011 = scalar_lea.sflag [#allocation6], %s1010
          %s1012 = sand.u32 %s219, 1
          %s1013 = smul.addr %s1012, 8
          %s1014 = scalar_lea.vmem [#allocation10], %s1013
          %1015 = dma.done %s1011, 128
        $region76: #{tpu_custom_call.1} parent=71 // pred_fallthru
          _
      $region72: #{tpu_custom_call.1} parent=5 // pred_fallthru
        _
    $region6: #{tpu_custom_call.1} parent=1 // loop_footer
      %s25 = sadd.s32 1, %s21
    $region7: #{tpu_custom_call.1} parent=1 // loop_footer_branch
      %20 = sbr.rel target = $region3
    $region8: #{tpu_custom_call.1} parent=1 // loop_exit
      _
    %1016 = vsyncpa [#allocation5], 1
    %s1017 = scalar_lea.sflag [#allocation5], 1
    %1018 = vsyncpa %s1017, 1
    %1019 = vsyncpa [#allocation8], 1
    %1020 = vsyncpa [#allocation6], 1
    %s1021 = scalar_lea.sflag [#allocation6], 1
    %1022 = vsyncpa %s1021, 1

</llo_original>
